<compile_context>
chip_gen: v6e
topology: v6e:2x2x1
jax: 0.10.0
libtpu: 0.0.40
codegen_flags: <defaults>
</compile_context>

<pallas_src>
import jax
import jax.numpy as jnp
from jax.experimental import pallas as pl
from jax.experimental.pallas import tpu as pltpu


# ----------------------------------------------------------------------------- utilities
def _cdiv(a: int, b: int) -> int:
    return -(-a // b)


def _round_up(x: int, m: int) -> int:
    return ((x + m - 1) // m) * m


def _device_kind() -> str:
    try:
        return jax.devices()[0].device_kind.lower()
    except Exception:
        return ""


def _is_v7x() -> bool:
    return "v7" in _device_kind()


def _vmem_capacity_bytes() -> int:
    """Physical VMEM per TensorCore: 64 MiB on v7x, 128 MiB on v5e/v6e."""
    try:
        info = pltpu.get_tpu_info()
        cap = int(getattr(info, "vmem_capacity_bytes", 0) or 0)
        if cap > 0:
            return cap
    except Exception:
        pass
    return 64 * 1024 * 1024 if _is_v7x() else 128 * 1024 * 1024


# ------------------------------------------------------------------------------- planner
def _plan_tiles(M, Din, Dout, x_isz, w_isz, o_isz, use_norm, residual,
                tk_req=None, tn_req=None):
    row_gran = 8 * max(1, 4 // x_isz)            # 8 (f32) / 16 (bf16) / 32 (int8)
    Np = _round_up(Dout, 128)                    # lane-dense padded output width

    vmem_cap = _vmem_capacity_bytes()
    vmem_limit = int(vmem_cap * 0.75)            # ~96 MiB v5e/v6e, ~48 MiB v7x
    budget = vmem_limit - (8 << 20)              # headroom for Mosaic internal scratch

    # --- N plan: LayerNorm needs the whole row resident, otherwise tile N ------------
    if use_norm:
        tn = Np
        # TODO(synk): two-pass LayerNorm statistics across N tiles for extreme Dout where
        # even tm == row_gran with the full Np resident would not fit VMEM.
    else:
        tn = _round_up(min(tn_req, Np), 128) if tn_req else min(Np, 2048)
    tn = min(tn, Np)
    gn = _cdiv(Np, tn)

    # --- K plan -----------------------------------------------------------------------
    if tk_req:
        tk = min(_round_up(tk_req, 128), _round_up(Din, 128))
    elif Din <= 1024:
        tk = Din
    else:
        tk = 512
    # Shrink tk if the double-buffered weight block alone would eat the budget.
    while tk > 128 and 2 * tk * tn * w_isz > budget // 2:
        tk = max(128, _round_up(tk // 2, 128))
    if tk >= Din:
        tk, Kp, gk = Din, Din, 1                 # single K step, no padded copy of x
    else:
        if Din % tk != 0:                        # prefer a tk dividing Din (no x col pad)
            for cand in range(tk, 127, -128):
                if Din % cand == 0:
                    tk = cand
                    break
        Kp = _round_up(Din, tk)
        gk = Kp // tk
    multi_k = gk > 1

    # Residual: reuse the matmul x block only when it already equals the full output row.
    sep_res = residual and not (gk == 1 and gn == 1 and Din == Np)

    # --- row tile from the remaining budget ---------------------------------------------
    fixed = 2 * tk * tn * w_isz + 8 * tn * 4                 # weights + bias/gamma/beta
    per_row = 2 * tk * x_isz + 2 * tn * o_isz + 2 * tn * 4   # x in, out, epilogue temps
    if multi_k:
        per_row += tn * 4                                    # f32 accumulator scratch
    if sep_res:
        per_row += 2 * tn * x_isz                            # residual input stream
    tm_cap = 1024 if vmem_cap >= (96 << 20) else 512
    avail = max(budget - fixed, 0)
    tm = avail // per_row if per_row > 0 else tm_cap
    tm = max(row_gran, min(tm, tm_cap))
    tm = (tm // row_gran) * row_gran
    if M <= row_gran:
        tm = M                                               # full-dim block, tiny inputs
    else:
        tm = min(tm, _round_up(M, row_gran))
    gm = _cdiv(M, tm)

    # v7x has 2 TensorCores: the "parallel" row axis needs >= 2 tiles to use both.
    if _is_v7x() and gm == 1 and M >= 2 * row_gran:
        tm = _round_up(_cdiv(M, 2), row_gran)
        gm = _cdiv(M, tm)

    footprint = fixed + tm * per_row
    vmem_limit = int(min(vmem_cap - (2 << 20), max(vmem_limit, footprint + (8 << 20))))

    return dict(tm=tm, tk=tk, tn=tn, Kp=Kp, Np=Np, gm=gm, gn=gn, gk=gk,
                multi_k=multi_k, sep_res=sep_res, vmem_limit=vmem_limit)


# -------------------------------------------------------------------------------- kernel
def _make_kernel(*, use_norm, residual, sep_res, multi_k, d_out, pad_cols, eps):
    inv_n = 1.0 / float(d_out)

    def kernel(*refs):
        it = iter(refs)
        x_ref = next(it)                                   # (tm, tk)   native dtype
        w_ref = next(it)                                   # (tk, tn)   native dtype
        b_ref = next(it)                                   # (1, tn)    f32
        gamma_ref = next(it) if use_norm else None         # (1, tn)    f32
        beta_ref = next(it) if use_norm else None          # (1, tn)    f32
        res_ref = next(it) if (residual and sep_res) else None   # (tm, tn)
        o_ref = next(it)                                   # (tm, tn)   output
        acc_ref = next(it) if multi_k else None            # (tm, tn)   f32 scratch

        def epilogue(y):
            # y: (tm, tn) f32 with bias already added; padded lanes are exactly zero.
            if use_norm:
                # Two-pass (centered) statistics: no E[x^2]-E[x]^2 cancellation.  Padded
                # lanes are zero, so their centered contribution pad_cols*mean^2 is
                # removed exactly; divide by the *real* Dout.
                mean = jnp.sum(y, axis=-1, keepdims=True) * inv_n
                d = y - mean
                s2 = jnp.sum(d * d, axis=-1, keepdims=True)
                if pad_cols:
                    s2 = s2 - float(pad_cols) * (mean * mean)
                var = jnp.maximum(s2 * inv_n, 0.0)
                y = d * jax.lax.rsqrt(var + eps)
                y = y * gamma_ref[...] + beta_ref[...]     # padded lanes -> 0
            y = jnp.maximum(y, 0.0)                        # ReLU
            if residual:
                r = res_ref[...] if sep_res else x_ref[...]
                y = y + r.astype(jnp.float32)              # activation(out) + x
            o_ref[...] = y.astype(o_ref.dtype)

        if multi_k:
            k = pl.program_id(2)

            @pl.when(k == 0)
            def _():
                acc_ref[...] = jnp.zeros_like(acc_ref)

            # Native-dtype MXU feed, f32 accumulation.
            acc_ref[...] += jnp.dot(x_ref[...], w_ref[...],
                                    preferred_element_type=jnp.float32)

            @pl.when(k == pl.num_programs(2) - 1)
            def _():
                acc_ref[...] += b_ref[...]                 # bias in place (no extra temp)
                epilogue(acc_ref[...])
        else:
            # Single K step: no accumulator scratch / zero-fill round trip.
            y = jnp.dot(x_ref[...], w_ref[...],
                        preferred_element_type=jnp.float32) + b_ref[...]
            epilogue(y)

    return kernel


# ------------------------------------------------------------------------------- wrapper
def fcblock_forward(x, w, b, gamma=None, beta=None, *, norm_layer=False, eps=1e-5,
                    tk=None, tn=None):
    """FCBlock forward.  x: (B, T, Din); w: (Din, Dout); b/gamma/beta: (Dout,)."""
    B, T, Din = x.shape
    Kw, Dout = w.shape
    assert Kw == Din, "weight shape mismatch"
    residual = (Din == Dout)
    use_norm = bool(norm_layer)
    M = B * T

    x_isz = jnp.dtype(x.dtype).itemsize
    w_isz = jnp.dtype(w.dtype).itemsize
    o_isz = x_isz

    p = _plan_tiles(M, Din, Dout, x_isz, w_isz, o_isz, use_norm, residual,
                    tk_req=tk, tn_req=tn)
    tm, tk_e, tn_e = p["tm"], p["tk"], p["tn"]
    Kp, Np, gm, gn, gk = p["Kp"], p["Np"], p["gm"], p["gn"], p["gk"]
    multi_k, sep_res = p["multi_k"], p["sep_res"]

    # --- operands (no row padding of x; cheap zero column padding only where needed) ----
    x2 = x.reshape(M, Din)
    x_mm = x2 if Kp == Din else jnp.pad(x2, ((0, 0), (0, Kp - Din)))
    w_p = w if (Kp == Din and Np == Dout) else jnp.pad(w, ((0, Kp - Din), (0, Np - Dout)))
    b_p = jnp.pad(b.astype(jnp.float32), (0, Np - Dout)).reshape(1, Np)

    in_specs = [
        pl.BlockSpec((tm, tk_e), lambda i, j, k: (i, k)),     # x (matmul operand)
        pl.BlockSpec((tk_e, tn_e), lambda i, j, k: (k, j)),   # weight tile
        pl.BlockSpec((1, tn_e), lambda i, j, k: (0, j)),      # bias (f32)
    ]
    inputs = [x_mm, w_p, b_p]

    if use_norm:
        if gamma is None:
            gamma = jnp.ones((Dout,), jnp.float32)
        if beta is None:
            beta = jnp.zeros((Dout,), jnp.float32)
        g_p = jnp.pad(gamma.astype(jnp.float32), (0, Np - Dout)).reshape(1, Np)
        bt_p = jnp.pad(beta.astype(jnp.float32), (0, Np - Dout)).reshape(1, Np)
        in_specs += [pl.BlockSpec((1, tn_e), lambda i, j, k: (0, j)),
                     pl.BlockSpec((1, tn_e), lambda i, j, k: (0, j))]
        inputs += [g_p, bt_p]

    if residual and sep_res:
        x_res = x2 if Din == Np else jnp.pad(x2, ((0, 0), (0, Np - Din)))
        in_specs.append(pl.BlockSpec((tm, tn_e), lambda i, j, k: (i, j)))
        inputs.append(x_res)

    kernel = _make_kernel(use_norm=use_norm, residual=residual, sep_res=sep_res,
                          multi_k=multi_k, d_out=Dout, pad_cols=Np - Dout,
                          eps=float(eps))

    cost = pl.CostEstimate(
        flops=2 * M * Din * Dout,
        transcendentals=(M if use_norm else 0),
        bytes_accessed=(M * Din * x_isz
                        + gm * Kp * Np * w_isz            # weight streamed per row tile
                        + M * Np * o_isz
                        + (M * Np * x_isz if (residual and sep_res) else 0)),
    )

    out = pl.pallas_call(
        kernel,
        out_shape=jax.ShapeDtypeStruct((M, Np), x.dtype),
        grid_spec=pltpu.PrefetchScalarGridSpec(
            num_scalar_prefetch=0,
            grid=(gm, gn, gk),
            in_specs=in_specs,
            out_specs=pl.BlockSpec((tm, tn_e), lambda i, j, k: (i, j)),
            scratch_shapes=([pltpu.VMEM((tm, tn_e), jnp.float32)] if multi_k else []),
        ),
        compiler_params=pltpu.CompilerParams(
            dimension_semantics=("parallel", "parallel", "arbitrary"),
            vmem_limit_bytes=p["vmem_limit"],
        ),
        cost_estimate=cost,
    )(*inputs)

    if Np != Dout:
        out = out[:, :Dout]
    return out.reshape(B, T, Dout)


# ------------------------------------------------------------------------------ testing
def _reference(x, w, b, gamma, beta, *, norm_layer, eps=1e-5):
    out = jnp.einsum("btd,de->bte", x.astype(jnp.float32),
                     w.astype(jnp.float32)) + b.astype(jnp.float32)
    if norm_layer:
        mean = jnp.mean(out, axis=-1, keepdims=True)
        var = jnp.mean((out - mean) ** 2, axis=-1, keepdims=True)
        out = (out - mean) / jnp.sqrt(var + eps) * gamma + beta
    out = jnp.maximum(out, 0.0)
    if x.shape[-1] == w.shape[1]:
        out = out + x.astype(jnp.float32)
    return out.astype(x.dtype)


if __name__ == "__main__":
    root_key = jax.random.PRNGKey(0)

    def bf16_exact(a):
        # bf16-representable f32 values -> matmul results independent of MXU precision path.
        return a.astype(jnp.bfloat16).astype(jnp.float32)

    def run_case(B, T, Din, Dout, norm_layer, key, **kw):
        kx, kwgt, kb = jax.random.split(key, 3)
        bound = 1.0 / (Din ** 0.5)                        # PyTorch-like Linear init
        x = bf16_exact(jax.random.normal(kx, (B, T, Din), dtype=jnp.float32))
        w = bf16_exact(jax.random.uniform(kwgt, (Din, Dout), minval=-bound,
                                          maxval=bound, dtype=jnp.float32))
        b = jax.random.uniform(kb, (Dout,), minval=-bound, maxval=bound,
                               dtype=jnp.float32)
        gamma = jnp.ones((Dout,), jnp.float32)
        beta = jnp.zeros((Dout,), jnp.float32)

        out = fcblock_forward(x, w, b, gamma, beta, norm_layer=norm_layer, **kw)
        out = jax.block_until_ready(out)
        ref = _reference(x, w, b, gamma, beta, norm_layer=norm_layer)
        assert out.shape == (B, T, Dout)
        assert jnp.allclose(out, ref, atol=1e-4, rtol=1e-4), \
            f"mismatch vs reference for case {(B, T, Din, Dout, norm_layer, kw)}"

    keys = jax.random.split(root_key, 5)
    # Linear + LayerNorm + ReLU + residual (single K step, padded-lane LN path).
    run_case(2, 8, 32, 32, True, keys[0])
    # Plain Linear + ReLU (no norm, no residual).
    run_case(2, 8, 32, 64, False, keys[1])
    # K-tiled accumulator + N-tiled output + residual (tk/tn forced small to exercise it).
    run_case(2, 8, 256, 256, False, keys[2], tk=128, tn=128)
    # K-tiled accumulator + LayerNorm (full row resident).
    run_case(2, 8, 256, 128, True, keys[3], tk=128)
    # Tiny ragged row count (M < 8) -> full-dim row block, no row padding.
    run_case(1, 5, 32, 64, False, keys[4])

    print("KERNEL_OK")
</pallas_src>

<mosaic_0001>
module attributes {stable_mosaic.version = 11 : i64} {
  func.func @kernel(%arg0: i32, %arg1: i32, %arg2: i32, %arg3: memref<16x32xf32, #tpu.memory_space<vmem>>, %arg4: memref<32x128xf32, #tpu.memory_space<vmem>>, %arg5: memref<1x128xf32, #tpu.memory_space<vmem>>, %arg6: memref<1x128xf32, #tpu.memory_space<vmem>>, %arg7: memref<1x128xf32, #tpu.memory_space<vmem>>, %arg8: memref<16x128xf32, #tpu.memory_space<vmem>>, %arg9: memref<16x128xf32, #tpu.memory_space<vmem>>) attributes {dimension_semantics = [#tpu.dimension_semantics<parallel>, #tpu.dimension_semantics<parallel>, #tpu.dimension_semantics<arbitrary>], iteration_bounds = array<i64: 1, 1, 1>, scalar_prefetch = 0 : i64, scratch_operands = 0 : i64, tpu.core_type = #tpu.core_type<tc>, window_params = [{transform_indices = @transform_0, window_bounds = array<i64: 16, 32>}, {transform_indices = @transform_1, window_bounds = array<i64: 32, 128>}, {transform_indices = @transform_2, window_bounds = array<i64: 1, 128>}, {transform_indices = @transform_3, window_bounds = array<i64: 1, 128>}, {transform_indices = @transform_4, window_bounds = array<i64: 1, 128>}, {transform_indices = @transform_5, window_bounds = array<i64: 16, 128>}, {transform_indices = @transform_6, window_bounds = array<i64: 16, 128>}]} {
    %c0 = arith.constant 0 : index
    %c0_0 = arith.constant 0 : index
    %0 = vector.load %arg3[%c0, %c0_0] : memref<16x32xf32, #tpu.memory_space<vmem>>, vector<16x32xf32>
    %c0_1 = arith.constant 0 : index
    %c0_2 = arith.constant 0 : index
    %1 = vector.load %arg4[%c0_1, %c0_2] : memref<32x128xf32, #tpu.memory_space<vmem>>, vector<32x128xf32>
    %cst = arith.constant dense<0.000000e+00> : vector<16x128xf32>
    %2 = tpu.matmul %0, %1, %cst {dimension_numbers = #tpu.dot_dimension_numbers<[1], [0], [0], [1], [0, 0, 1, 1], [], []>} : vector<16x32xf32>, vector<32x128xf32>, vector<16x128xf32> -> vector<16x128xf32>
    %c0_3 = arith.constant 0 : index
    %c0_4 = arith.constant 0 : index
    %3 = vector.load %arg5[%c0_3, %c0_4] : memref<1x128xf32, #tpu.memory_space<vmem>>, vector<1x128xf32>
    %4 = vector.broadcast %3 : vector<1x128xf32> to vector<16x128xf32>
    %5 = arith.addf %2, %4 : vector<16x128xf32>
    %cst_5 = arith.constant dense<0.000000e+00> : vector<16xf32>
    %6 = vector.multi_reduction <add>, %5, %cst_5 [1] : vector<16x128xf32> to vector<16xf32>
    %7 = vector.shape_cast %6 : vector<16xf32> to vector<16x1xf32>
    %cst_6 = arith.constant 3.125000e-02 : f32
    %8 = vector.broadcast %cst_6 : f32 to vector<16x1xf32>
    %9 = arith.mulf %7, %8 : vector<16x1xf32>
    %10 = vector.broadcast %9 : vector<16x1xf32> to vector<16x128xf32>
    %11 = arith.subf %5, %10 : vector<16x128xf32>
    %12 = arith.mulf %11, %11 : vector<16x128xf32>
    %cst_7 = arith.constant dense<0.000000e+00> : vector<16xf32>
    %13 = vector.multi_reduction <add>, %12, %cst_7 [1] : vector<16x128xf32> to vector<16xf32>
    %14 = vector.shape_cast %13 : vector<16xf32> to vector<16x1xf32>
    %15 = arith.mulf %9, %9 : vector<16x1xf32>
    %cst_8 = arith.constant 9.600000e+01 : f32
    %16 = vector.broadcast %cst_8 : f32 to vector<16x1xf32>
    %17 = arith.mulf %16, %15 : vector<16x1xf32>
    %18 = arith.subf %14, %17 : vector<16x1xf32>
    %cst_9 = arith.constant 3.125000e-02 : f32
    %19 = vector.broadcast %cst_9 : f32 to vector<16x1xf32>
    %20 = arith.mulf %18, %19 : vector<16x1xf32>
    %cst_10 = arith.constant 0.000000e+00 : f32
    %21 = vector.broadcast %cst_10 : f32 to vector<16x1xf32>
    %22 = arith.maximumf %20, %21 : vector<16x1xf32>
    %cst_11 = arith.constant 9.99999974E-6 : f32
    %23 = vector.broadcast %cst_11 : f32 to vector<16x1xf32>
    %24 = arith.addf %22, %23 : vector<16x1xf32>
    %25 = math.rsqrt %24 : vector<16x1xf32>
    %26 = vector.broadcast %25 : vector<16x1xf32> to vector<16x128xf32>
    %27 = arith.mulf %11, %26 : vector<16x128xf32>
    %c0_12 = arith.constant 0 : index
    %c0_13 = arith.constant 0 : index
    %28 = vector.load %arg6[%c0_12, %c0_13] : memref<1x128xf32, #tpu.memory_space<vmem>>, vector<1x128xf32>
    %29 = vector.broadcast %28 : vector<1x128xf32> to vector<16x128xf32>
    %30 = arith.mulf %27, %29 : vector<16x128xf32>
    %c0_14 = arith.constant 0 : index
    %c0_15 = arith.constant 0 : index
    %31 = vector.load %arg7[%c0_14, %c0_15] : memref<1x128xf32, #tpu.memory_space<vmem>>, vector<1x128xf32>
    %32 = vector.broadcast %31 : vector<1x128xf32> to vector<16x128xf32>
    %33 = arith.addf %30, %32 : vector<16x128xf32>
    %cst_16 = arith.constant 0.000000e+00 : f32
    %34 = vector.broadcast %cst_16 : f32 to vector<16x128xf32>
    %35 = arith.maximumf %33, %34 : vector<16x128xf32>
    %c0_17 = arith.constant 0 : index
    %c0_18 = arith.constant 0 : index
    %36 = vector.load %arg8[%c0_17, %c0_18] : memref<16x128xf32, #tpu.memory_space<vmem>>, vector<16x128xf32>
    %37 = arith.addf %35, %36 : vector<16x128xf32>
    %c0_19 = arith.constant 0 : index
    %c0_20 = arith.constant 0 : index
    %38 = vector.load %arg9[%c0_19, %c0_20] : memref<16x128xf32, #tpu.memory_space<vmem>>, vector<16x128xf32>
    tpu.vector_store %arg9[%c0_19, %c0_20], %37 {strides = array<i32>} : memref<16x128xf32, #tpu.memory_space<vmem>>, vector<16x128xf32>,
    return
  }
  func.func @transform_0(%arg0: i32, %arg1: i32, %arg2: i32) -> (i32, i32) {
    %c0_i32 = arith.constant 0 : i32
    return %arg0, %arg2 : i32, i32
  }
  func.func @transform_1(%arg0: i32, %arg1: i32, %arg2: i32) -> (i32, i32) {
    %c0_i32 = arith.constant 0 : i32
    return %arg2, %arg1 : i32, i32
  }
  func.func @transform_2(%arg0: i32, %arg1: i32, %arg2: i32) -> (i32, i32) {
    %c0_i32 = arith.constant 0 : i32
    %c0_i32_0 = arith.constant 0 : i32
    return %c0_i32, %arg1 : i32, i32
  }
  func.func @transform_3(%arg0: i32, %arg1: i32, %arg2: i32) -> (i32, i32) {
    %c0_i32 = arith.constant 0 : i32
    %c0_i32_0 = arith.constant 0 : i32
    return %c0_i32, %arg1 : i32, i32
  }
  func.func @transform_4(%arg0: i32, %arg1: i32, %arg2: i32) -> (i32, i32) {
    %c0_i32 = arith.constant 0 : i32
    %c0_i32_0 = arith.constant 0 : i32
    return %c0_i32, %arg1 : i32, i32
  }
  func.func @transform_5(%arg0: i32, %arg1: i32, %arg2: i32) -> (i32, i32) {
    %c0_i32 = arith.constant 0 : i32
    return %arg0, %arg1 : i32, i32
  }
  func.func @transform_6(%arg0: i32, %arg1: i32, %arg2: i32) -> (i32, i32) {
    %c0_i32 = arith.constant 0 : i32
    return %arg0, %arg1 : i32, i32
  }
}

</mosaic_0001>

<llo_original>
// kernel: tpu_custom_call.1
$region0: #{tpu_custom_call.1}
  #allocation0 [shape = 'u32[]', space=smem, size = 0x4, offset = 0x4, fixed_abs, tag = 'smem constant byte address 0x4 - core index']
  #allocation1 [shape = 'u32[144,128]{1,0:T(1,128)}', space=vmem, size = 0x12000, scoped, tag = 'internal scratch']
  %s0 = inlined_call_operand.hbm [shape: f32[16,32], index: 0, kind: input, shape index: {}]
  %s1 = inlined_call_operand.hbm [shape: f32[32,128], index: 1, kind: input, shape index: {}]
  %s2 = inlined_call_operand.vmem [shape: f32[1,128], index: 2, kind: input, shape index: {}]
  %s3 = inlined_call_operand.vmem [shape: f32[1,128], index: 3, kind: input, shape index: {}]
  %s4 = inlined_call_operand.vmem [shape: f32[1,128], index: 4, kind: input, shape index: {}]
  %s5 = inlined_call_operand.hbm [shape: f32[16,128], index: 5, kind: input, shape index: {}]
  %s6 = inlined_call_operand.hbm [shape: f32[16,128], index: 6, kind: output, shape index: {}]
  %s7 = sld [smem:[#allocation0]]
  $region46: #{tpu_custom_call.1} parent=0
    _
  %s9 = ssub.s32 1, %s7
  %s10 = scalar_select 0, %s9, %s7
  $region1: #{tpu_custom_call.1} parent=0
    #allocation2 [shape = 'u8[8192]{0}', space=vmem, size = 0x2000, scoped, tag = 'input window, operand 0, single buffered']
    #allocation3 [shape = 's32[1]{0}', space=sflag, size = 0x4, scoped, tag = 'scoped memory for tpu_custom_call.1']
    #allocation4 [shape = 's32[1]{0}', space=sflag, size = 0x4, scoped, tag = 'scoped memory for tpu_custom_call.1']
    #allocation5 [shape = 'u8[16384]{0}', space=vmem, size = 0x4000, scoped, tag = 'input window, operand 1, single buffered']
    #allocation6 [shape = 's32[1]{0}', space=sflag, size = 0x4, scoped, tag = 'scoped memory for tpu_custom_call.1']
    #allocation7 [shape = 'u8[8192]{0}', space=vmem, size = 0x2000, scoped, tag = 'input window, operand 5, single buffered']
    #allocation8 [shape = 'u8[8192]{0}', space=vmem, size = 0x2000, scoped, tag = 'output window, operand 0, single buffered']
    %11 = vsyncpa [#allocation3], 0
    %12 = vsyncpa [#allocation6], 0
    %13 = vsyncpa [#allocation4], 0
    // Predicated region
    $region2: #{tpu_custom_call.1} parent=1 // pred_check
      _
    $region3: #{tpu_custom_call.1} parent=1 // pred_check_branch
      %15 = sbr.rel (0) target = $region5
    $region4: #{tpu_custom_call.1} parent=1 // pred_region
      %s17 = ssub.s32 256, 256
      %18 = vsyncadd [#allocation3], %s17
      %s19 = sshll.u32 [#allocation2], 4
      %s20 = int_to_ptr.vmem [resolvable:$true] %s19
      %25 = dma.hbm_to_vmem [thread:$0]  %s0, 256, %s20, [#allocation3], 128, 128, 8
    $region5: #{tpu_custom_call.1} parent=1 // pred_fallthru
      _
    // Predicated region
    $region6: #{tpu_custom_call.1} parent=1 // pred_check
      _
    $region7: #{tpu_custom_call.1} parent=1 // pred_check_branch
      %27 = sbr.rel (0) target = $region9
    $region8: #{tpu_custom_call.1} parent=1 // pred_region
      %s29 = ssub.s32 512, 512
      %30 = vsyncadd [#allocation6], %s29
      %s31 = sshll.u32 [#allocation5], 4
      %s32 = int_to_ptr.vmem [resolvable:$true] %s31
      %37 = dma.hbm_to_vmem [thread:$0]  %s1, 512, %s32, [#allocation6], 128, 128, 8
    $region9: #{tpu_custom_call.1} parent=1 // pred_fallthru
      _
    // Predicated region
    $region10: #{tpu_custom_call.1} parent=1 // pred_check
      _
    $region11: #{tpu_custom_call.1} parent=1 // pred_check_branch
      %39 = sbr.rel (0) target = $region13
    $region12: #{tpu_custom_call.1} parent=1 // pred_region
      _
    $region13: #{tpu_custom_call.1} parent=1 // pred_fallthru
      _
    // Predicated region
    $region14: #{tpu_custom_call.1} parent=1 // pred_check
      _
    $region15: #{tpu_custom_call.1} parent=1 // pred_check_branch
      %41 = sbr.rel (0) target = $region17
    $region16: #{tpu_custom_call.1} parent=1 // pred_region
      _
    $region17: #{tpu_custom_call.1} parent=1 // pred_fallthru
      _
    // Predicated region
    $region18: #{tpu_custom_call.1} parent=1 // pred_check
      _
    $region19: #{tpu_custom_call.1} parent=1 // pred_check_branch
      %43 = sbr.rel (0) target = $region21
    $region20: #{tpu_custom_call.1} parent=1 // pred_region
      _
    $region21: #{tpu_custom_call.1} parent=1 // pred_fallthru
      _
    // Predicated region
    $region22: #{tpu_custom_call.1} parent=1 // pred_check
      _
    $region23: #{tpu_custom_call.1} parent=1 // pred_check_branch
      %45 = sbr.rel (0) target = $region25
    $region24: #{tpu_custom_call.1} parent=1 // pred_region
      %s47 = ssub.s32 256, 256
      %48 = vsyncadd [#allocation6], %s47
      %s49 = sshll.u32 [#allocation7], 4
      %s50 = int_to_ptr.vmem [resolvable:$true] %s49
      %55 = dma.hbm_to_vmem [thread:$0]  %s5, 256, %s50, [#allocation6], 128, 128, 8
    $region25: #{tpu_custom_call.1} parent=1 // pred_fallthru
      _
    // Predicated region
    $region26: #{tpu_custom_call.1} parent=1 // pred_check
      _
    $region27: #{tpu_custom_call.1} parent=1 // pred_check_branch
      %57 = sbr.rel (0) target = $region29
    $region28: #{tpu_custom_call.1} parent=1 // pred_region
      %58 = dma.done [#allocation3], 256
    $region29: #{tpu_custom_call.1} parent=1 // pred_fallthru
      _
    // Predicated region
    $region30: #{tpu_custom_call.1} parent=1 // pred_check
      _
    $region31: #{tpu_custom_call.1} parent=1 // pred_check_branch
      %60 = sbr.rel (0) target = $region33
    $region32: #{tpu_custom_call.1} parent=1 // pred_region
      %61 = dma.done [#allocation6], 512
    $region33: #{tpu_custom_call.1} parent=1 // pred_fallthru
      _
    // Predicated region
    $region34: #{tpu_custom_call.1} parent=1 // pred_check
      _
    $region35: #{tpu_custom_call.1} parent=1 // pred_check_branch
      %63 = sbr.rel (0) target = $region37
    $region36: #{tpu_custom_call.1} parent=1 // pred_region
      %64 = dma.done [#allocation6], 256
    $region37: #{tpu_custom_call.1} parent=1 // pred_fallthru
      _
    %v65 = vld [vmem:[#allocation2] sm:$0xff]
    %v66 = vld [vmem:[#allocation2 + $0x8] sm:$0xff]
    %v67 = vld [vmem:[#allocation5] sm:$0xff]
    %v68 = vld [vmem:[#allocation5 + $0x8] sm:$0xff]
    %v69 = vld [vmem:[#allocation5 + $0x10] sm:$0xff]
    %v70 = vld [vmem:[#allocation5 + $0x18] sm:$0xff]
    %v71 = vld [vmem:[%s2] sm:$0x1]
    %v73 = vlaneseq
    %v74 = vshrl.u32 %v73, 7
    %v75 = vsub.s32 0, %v74
    %v76 = vrot.slane %v71, %v75
    %vm78 = vcmask 261120
    %v80 = vsel %vm78, %v65, 0
    %v83 = vsel %vm78, %v66, 0
    %85 = vmatprep.subr.mxu0 0.0
    %86 = vmatpush1.msra.mxu0 0.0
    %87 = vmatprep.subr.mxu0 0.0
    %88 = vmatpush1.msra.mxu0 0.0
    %89 = vmatprep.subr.mxu0 0.0
    %90 = vmatpush1.msra.mxu0 0.0
    %91 = vmatprep.subr.mxu0 0.0
    %92 = vmatpush1.msra.mxu0 0.0
    %93 = vmatprep.subr.mxu0 0.0
    %94 = vmatpush1.msra.mxu0 0.0
    %95 = vmatprep.subr.mxu0 0.0
    %96 = vmatpush1.msra.mxu0 0.0
    %97 = vmatprep.subr.mxu0 0.0
    %98 = vmatpush1.msra.mxu0 0.0
    %99 = vmatprep.subr.mxu0 0.0
    %100 = vmatpush1.msra.mxu0 0.0
    %101 = vmatprep.subr.mxu0 0.0
    %102 = vmatpush1.msra.mxu0 0.0
    %103 = vmatprep.subr.mxu0 0.0
    %104 = vmatpush1.msra.mxu0 0.0
    %105 = vmatprep.subr.mxu0 0.0
    %106 = vmatpush1.msra.mxu0 0.0
    %107 = vmatprep.subr.mxu0 0.0
    %108 = vmatpush1.msra.mxu0 0.0
    %109 = vmatprep.subr.mxu0 0.0
    %110 = vmatpush1.msra.mxu0 %v70
    %111 = vmatprep.subr.mxu0 0.0
    %112 = vmatpush1.msra.mxu0 %v69
    %113 = vmatprep.subr.mxu0 0.0
    %114 = vmatpush1.msra.mxu0 %v68
    %115 = vmatprep.subr.mxu0 0.0
    %116 = vmatpush1.msra.mxu0 %v67
    %117 = vmatprep.subr.mxu0 0.0
    %118 = vmatpush2.msra.mxu0 0.0
    %119 = vmatprep.subr.mxu0 0.0
    %120 = vmatpush2.msra.mxu0 0.0
    %121 = vmatprep.subr.mxu0 0.0
    %122 = vmatpush2.msra.mxu0 0.0
    %123 = vmatprep.subr.mxu0 0.0
    %124 = vmatpush2.msra.mxu0 0.0
    %125 = vmatprep.subr.mxu0 0.0
    %126 = vmatpush2.msra.mxu0 0.0
    %127 = vmatprep.subr.mxu0 0.0
    %128 = vmatpush2.msra.mxu0 0.0
    %129 = vmatprep.subr.mxu0 0.0
    %130 = vmatpush2.msra.mxu0 0.0
    %131 = vmatprep.subr.mxu0 0.0
    %132 = vmatpush2.msra.mxu0 0.0
    %133 = vmatprep.subr.mxu0 0.0
    %134 = vmatpush2.msra.mxu0 0.0
    %135 = vmatprep.subr.mxu0 0.0
    %136 = vmatpush2.msra.mxu0 0.0
    %137 = vmatprep.subr.mxu0 0.0
    %138 = vmatpush2.msra.mxu0 0.0
    %139 = vmatprep.subr.mxu0 0.0
    %140 = vmatpush2.msra.mxu0 0.0
    %141 = vmatprep.subr.mxu0 0.0
    %142 = vmatpush2.msra.mxu0 0.0
    %143 = vmatprep.subr.mxu0 0.0
    %144 = vmatpush2.msra.mxu0 0.0
    %145 = vmatprep.subr.mxu0 0.0
    %146 = vmatpush2.msra.mxu0 0.0
    %147 = vmatprep.subr.mxu0 0.0
    %148 = vmatpush2.msra.mxu0 0.0
    %149 = vmatprep.mubr.f32.mxu0 0.0
    %150 = vmatmul.mubr.f32.gmra.mxu0 %v80
    %v151 = vpop.f32.mrf.mxu0
    %v152 = vadd.f32 %v76, %v151
    %v153 = vpop.f32.mrf.mxu0
    %154 = vmatprep.mubr.f32.mxu0 0.0
    %155 = vmatmul.mubr.f32.gmra.mxu0 %v83
    %v156 = vpop.f32.mrf.mxu0
    %v157 = vadd.f32 %v76, %v156
    %v158 = vpop.f32.mrf.mxu0
    %159 = vdwg.mxu0
    %160 = vadd.xlane.f32.xlu0 %v152
    %v161 = vpop.xlane.xlu0 %160
    %162 = vadd.xlane.f32.xlu0 %v157
    %v163 = vpop.xlane.xlu0 %162
    %v164 = vmul.f32 %v161, 0.03125
    %v165 = vmul.f32 %v163, 0.03125
    %v166 = vsub.f32 %v152, %v164
    %v167 = vsub.f32 %v157, %v165
    %v168 = vmul.f32 %v166, %v166
    %v169 = vmul.f32 %v167, %v167
    %170 = vadd.xlane.f32.xlu0 %v168
    %v171 = vpop.xlane.xlu0 %170
    %172 = vadd.xlane.f32.xlu0 %v169
    %v173 = vpop.xlane.xlu0 %172
    %v174 = vmul.f32 %v164, %v164
    %v175 = vmul.f32 %v165, %v165
    %v176 = vmul.f32 %v174, 96.0
    %v177 = vmul.f32 %v175, 96.0
    %v178 = vsub.f32 %v171, %v176
    %v179 = vsub.f32 %v173, %v177
    %v180 = vmul.f32 %v178, 0.03125
    %v181 = vmul.f32 %v179, 0.03125
    %v182 = vmax.f32 %v180, 0.0
    %v183 = vmax.f32 %v181, 0.0
    %v184 = vadd.f32 %v182, 1e-05
    %v185 = vadd.f32 %v183, 1e-05
    %v186 = vrsqrt.pop %v184
    %v187 = vrsqrt.pop %v185
    %v188 = vmul.f32 %v166, %v186
    %v189 = vmul.f32 %v167, %v187
    %v190 = vld [vmem:[%s3] sm:$0x1]
    %v192 = vlaneseq
    %v193 = vshrl.u32 %v192, 7
    %v194 = vsub.s32 0, %v193
    %v195 = vrot.slane %v190, %v194
    %v197 = vmul.f32 %v188, %v195
    %v198 = vmul.f32 %v189, %v195
    %v199 = vld [vmem:[%s4] sm:$0x1]
    %v201 = vlaneseq
    %v202 = vshrl.u32 %v201, 7
    %v203 = vsub.s32 0, %v202
    %v204 = vrot.slane %v199, %v203
    %v206 = vadd.f32 %v197, %v204
    %v207 = vadd.f32 %v198, %v204
    %v208 = vmax.f32 %v206, 0.0
    %v209 = vmax.f32 %v207, 0.0
    %v210 = vld [vmem:[#allocation7] sm:$0xff]
    %v211 = vld [vmem:[#allocation7 + $0x8] sm:$0xff]
    %v212 = vadd.f32 %v208, %v210
    %v213 = vadd.f32 %v209, %v211
    %214 = vst [vmem:[#allocation8] sm:$0xff] %v212
    %215 = vst [vmem:[#allocation8 + $0x8] sm:$0xff] %v213
    // Predicated region
    $region38: #{tpu_custom_call.1} parent=1 // pred_check
      _
    $region39: #{tpu_custom_call.1} parent=1 // pred_check_branch
      %217 = sbr.rel (0) target = $region41
    $region40: #{tpu_custom_call.1} parent=1 // pred_region
      %s219 = ssub.s32 256, 256
      %220 = vsyncadd [#allocation4], %s219
      %s221 = sshll.u32 [#allocation8], 4
      %s222 = int_to_ptr.vmem [resolvable:$true] %s221
      %227 = dma.vmem_to_hbm [thread:$0]  %s222, 256, %s6, [#allocation4], 128, 128, 8
    $region41: #{tpu_custom_call.1} parent=1 // pred_fallthru
      _
    // Predicated region
    $region42: #{tpu_custom_call.1} parent=1 // pred_check
      _
    $region43: #{tpu_custom_call.1} parent=1 // pred_check_branch
      %229 = sbr.rel (0) target = $region45
    $region44: #{tpu_custom_call.1} parent=1 // pred_region
      %230 = dma.done [#allocation4], 256
    $region45: #{tpu_custom_call.1} parent=1 // pred_fallthru
      _
    %231 = vsyncpa [#allocation3], 1
    %232 = vsyncpa [#allocation6], 1
    %233 = vsyncpa [#allocation4], 1

</llo_original>
